<compile_context>
chip_gen: v5e
topology: v5e:2x2
jax: 0.10.0
libtpu: 0.0.40
codegen_flags: <defaults>
</compile_context>

<pallas_src>
import functools

import jax
import jax.numpy as jnp
from jax.experimental import pallas as pl
from jax.experimental.pallas import tpu as pltpu


# ----------------------------------------------------------------------------
# Kernel A: pooled phi^T / g projections (one grid step per batch element).
# ----------------------------------------------------------------------------
def _pool_proj_kernel(H, Wp, C, IC,
                      xcp_ref, wpl_ref, wpr_ref, wgl_ref, wgr_ref, bg_ref,
                      phiT_ref, g_ref):
    Hp = H // 2
    Np = Hp * Wp
    cdt = wpl_ref.dtype

    # (H, Wp, 2C) -> (H*Wp, 2C): merge of leading dims only (layout friendly).
    xc = xcp_ref[0].reshape(H * Wp, 2 * C).astype(cdt)

    def col_pooled(wl_ref, wr_ref):
        # Left / right pixel of each column pair via zero-padded weights:
        # avoids lane-offset channel slices entirely.
        vl = jnp.dot(xc, wl_ref[...], preferred_element_type=jnp.float32)
        vr = jnp.dot(xc, wr_ref[...], preferred_element_type=jnp.float32)
        return jnp.maximum(vl, vr)                        # (H*Wp, IC)

    def row_pooled(v):
        # (H*Wp, IC) -> (Hp, 2, Wp, IC): split of the MAJOR dims only,
        # then reduce the row-pair axis.
        v4 = v.reshape(Hp, 2, Wp, IC)
        return jnp.max(v4, axis=1).reshape(Np, IC)        # (Np, IC)

    # phi: the conv bias is constant per channel -> cancels in softmax, drop it.
    phi_p = row_pooled(col_pooled(wpl_ref, wpr_ref))      # (Np, IC)
    # g: bias is spatially constant, so it commutes with max-pool (add after).
    g_p = row_pooled(col_pooled(wgl_ref, wgr_ref)) + bg_ref[...]

    # Store phi transposed once per batch so kernel B needs no per-tile
    # transpose for the logits matmul.
    phiT_ref[0] = jnp.transpose(phi_p).astype(phiT_ref.dtype)   # (IC, Np)
    g_ref[0] = g_p.astype(g_ref.dtype)                           # (Np, IC)


# ----------------------------------------------------------------------------
# Kernel B: tiled attention + fused W-conv/BN + residual.
# ----------------------------------------------------------------------------
def _attn_kernel(x_ref, phiT_ref, g_ref, wt_ref, bt_ref, ww_ref, bw_ref,
                 out_ref):
    cdt = wt_ref.dtype
    x = x_ref[0]                                                  # (TQ, C)

    # theta = 1x1 conv on this query tile (MXU, f32 accumulation).
    theta = jnp.dot(x.astype(cdt), wt_ref[...],
                    preferred_element_type=jnp.float32) + bt_ref[...]   # (TQ, IC)

    # Attention logits for this tile: (TQ, IC) @ (IC, Np).
    f = jnp.dot(theta.astype(cdt), phiT_ref[0],
                preferred_element_type=jnp.float32)               # (TQ, Np)

    # Softmax over Np (f32).  EUP approximate reciprocal + one Newton step
    # (keeps f32 accuracy while staying off the VPU divide path).
    f = f - jnp.max(f, axis=-1, keepdims=True)
    p = jnp.exp(f)
    denom = jnp.sum(p, axis=-1, keepdims=True)
    inv = pl.reciprocal(denom, approx=True)
    inv = inv * (2.0 - denom * inv)
    p = p * inv

    # y = p @ g, then fused (W 1x1 conv + eval BatchNorm) and residual.
    y = jnp.dot(p.astype(cdt), g_ref[0],
                preferred_element_type=jnp.float32)               # (TQ, IC)
    wy = jnp.dot(y.astype(cdt), ww_ref[...],
                 preferred_element_type=jnp.float32) + bw_ref[...]  # (TQ, C)
    out_ref[0] = (wy + x.astype(jnp.float32)).astype(out_ref.dtype)


def _pick_tq(N):
    for t in (512, 256, 128):
        if N % t == 0 and N // t >= 2:
            return t
    for t in (512, 256, 128, 64, 32, 16, 8):
        if N % t == 0:
            return t
    return N


def nonlocal_block_forward(x_nchw, params, eps=1e-5):
    B, C, H, W = x_nchw.shape
    assert H % 2 == 0 and W % 2 == 0, "2x2 sub-sampling assumes even H, W"
    IC = params["w_theta"].shape[0]
    N = H * W
    Hp, Wp = H // 2, W // 2
    Np = Hp * Wp

    in_dtype = x_nchw.dtype
    cdt = jnp.bfloat16 if in_dtype == jnp.bfloat16 else jnp.float32
    f32 = jnp.float32

    x_nhwc = jnp.transpose(x_nchw, (0, 2, 3, 1))
    x_flat = x_nhwc.reshape(B, N, C)                 # (B, N, C)
    # Free bitcast reshape: adjacent column pair concatenated along channels.
    x_cp = x_nhwc.reshape(B, H, Wp, 2 * C)           # same HBM buffer as x_flat

    def pair_weights(w):                              # w: (IC, C) torch layout
        wt_ = w.astype(f32).T                         # (C, IC)
        z = jnp.zeros_like(wt_)
        wl = jnp.concatenate([wt_, z], axis=0).astype(cdt)   # left pixel
        wr = jnp.concatenate([z, wt_], axis=0).astype(cdt)   # right pixel
        return wl, wr

    wpl, wpr = pair_weights(params["w_phi"])
    wgl, wgr = pair_weights(params["w_g"])
    bg = params["b_g"].astype(f32).reshape(1, IC)

    wt = params["w_theta"].astype(f32).T.astype(cdt)          # (C, IC)
    bt = params["b_theta"].astype(f32).reshape(1, IC)

    # Fuse eval-mode BatchNorm2d into the W 1x1 conv (pure affine).
    s = params["bn_gamma"] / jnp.sqrt(params["bn_var"] + eps)          # (C,)
    ww_eff = (params["w_W"] * s[:, None]).astype(f32).T.astype(cdt)    # (IC, C)
    bw_eff = ((params["b_W"] - params["bn_mean"]) * s
              + params["bn_beta"]).astype(f32).reshape(1, C)

    cparams_a = pltpu.CompilerParams(
        dimension_semantics=("parallel",),
        vmem_limit_bytes=32 * 1024 * 1024)

    def full_spec1(a):
        nd = a.ndim
        return pl.BlockSpec(a.shape, lambda b, _nd=nd: (0,) * _nd)

    # --- Kernel A: per-batch pooled phi^T and g projections ------------------
    phi_T, g_p = pl.pallas_call(
        functools.partial(_pool_proj_kernel, H, Wp, C, IC),
        out_shape=(jax.ShapeDtypeStruct((B, IC, Np), cdt),
                   jax.ShapeDtypeStruct((B, Np, IC), cdt)),
        grid=(B,),
        in_specs=[
            pl.BlockSpec((1, H, Wp, 2 * C), lambda b: (b, 0, 0, 0)),
            full_spec1(wpl), full_spec1(wpr),
            full_spec1(wgl), full_spec1(wgr),
            full_spec1(bg),
        ],
        out_specs=(pl.BlockSpec((1, IC, Np), lambda b: (b, 0, 0)),
                   pl.BlockSpec((1, Np, IC), lambda b: (b, 0, 0))),
        compiler_params=cparams_a,
    )(x_cp, wpl, wpr, wgl, wgr, bg)

    # --- Kernel B: attention tiled over the query/token dimension ------------
    TQ = _pick_tq(N)
    nq = N // TQ

    def full_spec2(a):
        nd = a.ndim
        return pl.BlockSpec(a.shape, lambda b, q, _nd=nd: (0,) * _nd)

    isz = jnp.dtype(in_dtype).itemsize
    csz = jnp.dtype(cdt).itemsize
    cost = pl.CostEstimate(
        flops=2 * B * N * (C * IC + Np * IC + Np * IC + IC * C),
        transcendentals=B * N * Np,
        bytes_accessed=2 * B * N * C * isz + 2 * B * Np * IC * csz,
    )

    out = pl.pallas_call(
        _attn_kernel,
        out_shape=jax.ShapeDtypeStruct((B, N, C), in_dtype),
        grid=(B, nq),
        in_specs=[
            pl.BlockSpec((1, TQ, C), lambda b, q: (b, q, 0)),
            pl.BlockSpec((1, IC, Np), lambda b, q: (b, 0, 0)),
            pl.BlockSpec((1, Np, IC), lambda b, q: (b, 0, 0)),
            full_spec2(wt), full_spec2(bt),
            full_spec2(ww_eff), full_spec2(bw_eff),
        ],
        out_specs=pl.BlockSpec((1, TQ, C), lambda b, q: (b, q, 0)),
        compiler_params=pltpu.CompilerParams(
            dimension_semantics=("parallel", "parallel"),
            vmem_limit_bytes=32 * 1024 * 1024),
        cost_estimate=cost,
    )(x_flat, phi_T, g_p, wt, bt, ww_eff, bw_eff)

    return out.reshape(B, H, W, C).transpose(0, 3, 1, 2)   # back to NCHW


# ----------------------------------------------------------------------------
# Pure-JAX reference mirroring the PyTorch forward (NCHW, f32).
# ----------------------------------------------------------------------------
def reference_forward(x, params, eps=1e-5):
    B, C, H, W = x.shape
    IC = params["w_theta"].shape[0]

    def conv1x1(v, w, b):
        return jnp.einsum("bchw,oc->bohw", v, w) + b[None, :, None, None]

    def maxpool2x2(v):
        Bv, O, Hv, Wv = v.shape
        return v.reshape(Bv, O, Hv // 2, 2, Wv // 2, 2).max(axis=(3, 5))

    g_x = maxpool2x2(conv1x1(x, params["w_g"], params["b_g"])).reshape(B, IC, -1)
    g_x = jnp.transpose(g_x, (0, 2, 1))
    theta_x = conv1x1(x, params["w_theta"], params["b_theta"]).reshape(B, IC, -1)
    theta_x = jnp.transpose(theta_x, (0, 2, 1))
    phi_x = maxpool2x2(conv1x1(x, params["w_phi"], params["b_phi"])).reshape(B, IC, -1)
    f = jnp.einsum("bnc,bcm->bnm", theta_x, phi_x)
    f_div_C = jax.nn.softmax(f, axis=-1)
    y = jnp.einsum("bnm,bmc->bnc", f_div_C, g_x)
    y = jnp.transpose(y, (0, 2, 1)).reshape(B, IC, H, W)
    w_y = conv1x1(y, params["w_W"], params["b_W"])
    s = params["bn_gamma"] / jnp.sqrt(params["bn_var"] + eps)
    w_y = (w_y - params["bn_mean"][None, :, None, None]) * s[None, :, None, None] \
        + params["bn_beta"][None, :, None, None]
    return w_y + x


def init_params(key, C, IC, faithful_bn=True):
    ks = jax.random.split(key, 8)
    p = {
        "w_theta": 0.2 * jax.random.normal(ks[0], (IC, C), jnp.float32),
        "b_theta": 0.1 * jax.random.normal(ks[1], (IC,), jnp.float32),
        "w_phi":   0.2 * jax.random.normal(ks[2], (IC, C), jnp.float32),
        "b_phi":   0.1 * jax.random.normal(ks[3], (IC,), jnp.float32),
        "w_g":     0.2 * jax.random.normal(ks[4], (IC, C), jnp.float32),
        "b_g":     0.1 * jax.random.normal(ks[5], (IC,), jnp.float32),
        "w_W":     0.2 * jax.random.normal(ks[6], (C, IC), jnp.float32),
        "b_W":     0.1 * jax.random.normal(ks[7], (C,), jnp.float32),
        "bn_mean": jnp.zeros((C,), jnp.float32),
        "bn_var":  jnp.ones((C,), jnp.float32),
    }
    if faithful_bn:
        # As in _NonLocalBlockND.__init__: nn.init.constant_(W[1].weight/bias, 0)
        p["bn_gamma"] = jnp.zeros((C,), jnp.float32)
        p["bn_beta"] = jnp.zeros((C,), jnp.float32)
    else:
        # Non-zero affine to exercise the full attention path numerically.
        p["bn_gamma"] = 0.7 * jnp.ones((C,), jnp.float32)
        p["bn_beta"] = 0.05 * jnp.ones((C,), jnp.float32)
    return p


if __name__ == "__main__":
    key = jax.random.PRNGKey(0)
    kx, kp = jax.random.split(key)
    B, C, H, W = 2, 4, 16, 16           # inter_channels = C // 2 = 2
    x = jax.random.normal(kx, (B, C, H, W), jnp.float32)

    # Faithful-to-__init__ params (zero-init BN -> block is identity at init).
    p_faithful = init_params(kp, C, C // 2, faithful_bn=True)
    out = jax.block_until_ready(nonlocal_block_forward(x, p_faithful))
    ref = reference_forward(x, p_faithful)
    assert jnp.allclose(out, ref, atol=1e-5, rtol=1e-5)
    assert jnp.allclose(out, x, atol=1e-5, rtol=1e-5)   # identity at init

    # Non-trivial W affine to verify attention + projection end to end (f32).
    p_rand = init_params(kp, C, C // 2, faithful_bn=False)
    out2 = jax.block_until_ready(nonlocal_block_forward(x, p_rand))
    ref2 = reference_forward(x, p_rand)
    assert jnp.allclose(out2, ref2, atol=1e-4, rtol=1e-4)

    # bf16 activation path: bf16 MXU operands, f32 accumulation, bf16 output.
    xb = x.astype(jnp.bfloat16)
    out3 = jax.block_until_ready(nonlocal_block_forward(xb, p_rand))
    assert out3.dtype == jnp.bfloat16
    assert jnp.allclose(out3.astype(jnp.float32), ref2, atol=5e-2, rtol=5e-2)

    print("KERNEL_OK")
</pallas_src>

<mosaic_0001>
module attributes {stable_mosaic.version = 11 : i64} {
  func.func @_pool_proj_kernel(%arg0: i32, %arg1: memref<1x16x8x8xf32, #tpu.memory_space<vmem>>, %arg2: memref<8x2xf32, #tpu.memory_space<vmem>>, %arg3: memref<8x2xf32, #tpu.memory_space<vmem>>, %arg4: memref<8x2xf32, #tpu.memory_space<vmem>>, %arg5: memref<8x2xf32, #tpu.memory_space<vmem>>, %arg6: memref<1x2xf32, #tpu.memory_space<vmem>>, %arg7: memref<1x2x64xf32, #tpu.memory_space<vmem>>, %arg8: memref<1x64x2xf32, #tpu.memory_space<vmem>>) attributes {dimension_semantics = [#tpu.dimension_semantics<parallel>], iteration_bounds = array<i64: 2>, scalar_prefetch = 0 : i64, scratch_operands = 0 : i64, tpu.core_type = #tpu.core_type<tc>, window_params = [{transform_indices = @transform_0, window_bounds = array<i64: 1, 16, 8, 8>}, {pipeline_mode = #tpu.pipeline_mode<synchronous>, transform_indices = @transform_1, window_bounds = array<i64: 8, 2>}, {pipeline_mode = #tpu.pipeline_mode<synchronous>, transform_indices = @transform_2, window_bounds = array<i64: 8, 2>}, {pipeline_mode = #tpu.pipeline_mode<synchronous>, transform_indices = @transform_3, window_bounds = array<i64: 8, 2>}, {pipeline_mode = #tpu.pipeline_mode<synchronous>, transform_indices = @transform_4, window_bounds = array<i64: 8, 2>}, {pipeline_mode = #tpu.pipeline_mode<synchronous>, transform_indices = @transform_5, window_bounds = array<i64: 1, 2>}, {transform_indices = @transform_6, window_bounds = array<i64: 1, 2, 64>}, {transform_indices = @transform_7, window_bounds = array<i64: 1, 64, 2>}]} {
    %c0 = arith.constant 0 : index
    %c0_0 = arith.constant 0 : index
    %c0_1 = arith.constant 0 : index
    %c0_2 = arith.constant 0 : index
    %0 = vector.load %arg1[%c0, %c0_0, %c0_1, %c0_2] : memref<1x16x8x8xf32, #tpu.memory_space<vmem>>, vector<1x16x8x8xf32>
    %1 = vector.shape_cast %0 : vector<1x16x8x8xf32> to vector<16x8x8xf32>
    %2 = vector.shape_cast %1 : vector<16x8x8xf32> to vector<128x8xf32>
    %c0_3 = arith.constant 0 : index
    %c0_4 = arith.constant 0 : index
    %3 = vector.load %arg2[%c0_3, %c0_4] : memref<8x2xf32, #tpu.memory_space<vmem>>, vector<8x2xf32>
    %cst = arith.constant dense<0.000000e+00> : vector<128x2xf32>
    %4 = tpu.matmul %2, %3, %cst {dimension_numbers = #tpu.dot_dimension_numbers<[1], [0], [0], [1], [0, 0, 1, 1], [], []>} : vector<128x8xf32>, vector<8x2xf32>, vector<128x2xf32> -> vector<128x2xf32>
    %c0_5 = arith.constant 0 : index
    %c0_6 = arith.constant 0 : index
    %5 = vector.load %arg3[%c0_5, %c0_6] : memref<8x2xf32, #tpu.memory_space<vmem>>, vector<8x2xf32>
    %cst_7 = arith.constant dense<0.000000e+00> : vector<128x2xf32>
    %6 = tpu.matmul %2, %5, %cst_7 {dimension_numbers = #tpu.dot_dimension_numbers<[1], [0], [0], [1], [0, 0, 1, 1], [], []>} : vector<128x8xf32>, vector<8x2xf32>, vector<128x2xf32> -> vector<128x2xf32>
    %7 = arith.maximumf %4, %6 : vector<128x2xf32>
    %8 = vector.shape_cast %7 : vector<128x2xf32> to vector<8x2x8x2xf32>
    %cst_8 = arith.constant dense<0xFF800000> : vector<8x8x2xf32>
    %9 = vector.multi_reduction <maximumf>, %8, %cst_8 [1] : vector<8x2x8x2xf32> to vector<8x8x2xf32>
    %10 = vector.shape_cast %9 : vector<8x8x2xf32> to vector<64x2xf32>
    %c0_9 = arith.constant 0 : index
    %c0_10 = arith.constant 0 : index
    %11 = vector.load %arg4[%c0_9, %c0_10] : memref<8x2xf32, #tpu.memory_space<vmem>>, vector<8x2xf32>
    %cst_11 = arith.constant dense<0.000000e+00> : vector<128x2xf32>
    %12 = tpu.matmul %2, %11, %cst_11 {dimension_numbers = #tpu.dot_dimension_numbers<[1], [0], [0], [1], [0, 0, 1, 1], [], []>} : vector<128x8xf32>, vector<8x2xf32>, vector<128x2xf32> -> vector<128x2xf32>
    %c0_12 = arith.constant 0 : index
    %c0_13 = arith.constant 0 : index
    %13 = vector.load %arg5[%c0_12, %c0_13] : memref<8x2xf32, #tpu.memory_space<vmem>>, vector<8x2xf32>
    %cst_14 = arith.constant dense<0.000000e+00> : vector<128x2xf32>
    %14 = tpu.matmul %2, %13, %cst_14 {dimension_numbers = #tpu.dot_dimension_numbers<[1], [0], [0], [1], [0, 0, 1, 1], [], []>} : vector<128x8xf32>, vector<8x2xf32>, vector<128x2xf32> -> vector<128x2xf32>
    %15 = arith.maximumf %12, %14 : vector<128x2xf32>
    %16 = vector.shape_cast %15 : vector<128x2xf32> to vector<8x2x8x2xf32>
    %cst_15 = arith.constant dense<0xFF800000> : vector<8x8x2xf32>
    %17 = vector.multi_reduction <maximumf>, %16, %cst_15 [1] : vector<8x2x8x2xf32> to vector<8x8x2xf32>
    %18 = vector.shape_cast %17 : vector<8x8x2xf32> to vector<64x2xf32>
    %c0_16 = arith.constant 0 : index
    %c0_17 = arith.constant 0 : index
    %19 = vector.load %arg6[%c0_16, %c0_17] : memref<1x2xf32, #tpu.memory_space<vmem>>, vector<1x2xf32>
    %20 = vector.broadcast %19 : vector<1x2xf32> to vector<64x2xf32>
    %21 = arith.addf %18, %20 : vector<64x2xf32>
    %22 = tpu.transpose %10, [1, 0] : vector<64x2xf32> -> vector<2x64xf32>
    %c0_18 = arith.constant 0 : index
    %c0_19 = arith.constant 0 : index
    %c0_20 = arith.constant 0 : index
    %23 = vector.load %arg7[%c0_18, %c0_19, %c0_20] : memref<1x2x64xf32, #tpu.memory_space<vmem>>, vector<1x2x64xf32>
    %24 = vector.shape_cast %23 : vector<1x2x64xf32> to vector<2x64xf32>
    %25 = vector.shape_cast %22 : vector<2x64xf32> to vector<1x2x64xf32>
    tpu.vector_store %arg7[%c0_18, %c0_19, %c0_20], %25 {strides = array<i32>} : memref<1x2x64xf32, #tpu.memory_space<vmem>>, vector<1x2x64xf32>,
    %c0_21 = arith.constant 0 : index
    %c0_22 = arith.constant 0 : index
    %c0_23 = arith.constant 0 : index
    %26 = vector.load %arg8[%c0_21, %c0_22, %c0_23] : memref<1x64x2xf32, #tpu.memory_space<vmem>>, vector<1x64x2xf32>
    %27 = vector.shape_cast %26 : vector<1x64x2xf32> to vector<64x2xf32>
    %28 = vector.shape_cast %21 : vector<64x2xf32> to vector<1x64x2xf32>
    tpu.vector_store %arg8[%c0_21, %c0_22, %c0_23], %28 {strides = array<i32>} : memref<1x64x2xf32, #tpu.memory_space<vmem>>, vector<1x64x2xf32>,
    return
  }
  func.func @transform_0(%arg0: i32) -> (i32, i32, i32, i32) {
    %c0_i32 = arith.constant 0 : i32
    %c0_i32_0 = arith.constant 0 : i32
    %c0_i32_1 = arith.constant 0 : i32
    %c0_i32_2 = arith.constant 0 : i32
    return %arg0, %c0_i32, %c0_i32_0, %c0_i32_1 : i32, i32, i32, i32
  }
  func.func @transform_1(%arg0: i32) -> (i32, i32) {
    %c0_i32 = arith.constant 0 : i32
    %c0_i32_0 = arith.constant 0 : i32
    %c0_i32_1 = arith.constant 0 : i32
    return %c0_i32, %c0_i32_0 : i32, i32
  }
  func.func @transform_2(%arg0: i32) -> (i32, i32) {
    %c0_i32 = arith.constant 0 : i32
    %c0_i32_0 = arith.constant 0 : i32
    %c0_i32_1 = arith.constant 0 : i32
    return %c0_i32, %c0_i32_0 : i32, i32
  }
  func.func @transform_3(%arg0: i32) -> (i32, i32) {
    %c0_i32 = arith.constant 0 : i32
    %c0_i32_0 = arith.constant 0 : i32
    %c0_i32_1 = arith.constant 0 : i32
    return %c0_i32, %c0_i32_0 : i32, i32
  }
  func.func @transform_4(%arg0: i32) -> (i32, i32) {
    %c0_i32 = arith.constant 0 : i32
    %c0_i32_0 = arith.constant 0 : i32
    %c0_i32_1 = arith.constant 0 : i32
    return %c0_i32, %c0_i32_0 : i32, i32
  }
  func.func @transform_5(%arg0: i32) -> (i32, i32) {
    %c0_i32 = arith.constant 0 : i32
    %c0_i32_0 = arith.constant 0 : i32
    %c0_i32_1 = arith.constant 0 : i32
    return %c0_i32, %c0_i32_0 : i32, i32
  }
  func.func @transform_6(%arg0: i32) -> (i32, i32, i32) {
    %c0_i32 = arith.constant 0 : i32
    %c0_i32_0 = arith.constant 0 : i32
    %c0_i32_1 = arith.constant 0 : i32
    return %arg0, %c0_i32, %c0_i32_0 : i32, i32, i32
  }
  func.func @transform_7(%arg0: i32) -> (i32, i32, i32) {
    %c0_i32 = arith.constant 0 : i32
    %c0_i32_0 = arith.constant 0 : i32
    %c0_i32_1 = arith.constant 0 : i32
    return %arg0, %c0_i32, %c0_i32_0 : i32, i32, i32
  }
}

</mosaic_0001>

<llo_original>
// kernel: tpu_custom_call.1
$region0: #{tpu_custom_call.1}
  #allocation0 [shape = 'u32[]', space=smem, size = 0x4, offset = 0x4, fixed_abs, tag = 'smem constant byte address 0x4 - core index']
  #allocation1 [shape = 'u32[72,128]{1,0:T(1,128)}', space=vmem, size = 0x9000, scoped, tag = 'internal scratch']
  %s0 = inlined_call_operand.vmem [shape: f32[2,16,8,8], index: 0, kind: input, shape index: {}]
  %s1 = inlined_call_operand.vmem [shape: f32[8,2], index: 1, kind: input, shape index: {}]
  %s2 = inlined_call_operand.vmem [shape: f32[8,2], index: 2, kind: input, shape index: {}]
  %s3 = inlined_call_operand.vmem [shape: f32[8,2], index: 3, kind: input, shape index: {}]
  %s4 = inlined_call_operand.vmem [shape: f32[8,2], index: 4, kind: input, shape index: {}]
  %s5 = inlined_call_operand.vmem [shape: f32[1,2], index: 5, kind: input, shape index: {}]
  %s6 = inlined_call_operand.hbm [shape: f32[2,2,64], index: 6, kind: output, shape index: {0}]
  %s7 = inlined_call_operand.vmem [shape: f32[2,64,2], index: 7, kind: output, shape index: {1}]
  %8 = xla_tuple %s6, %s7
  %s9 = sld [smem:[#allocation0]]
  $region65: #{tpu_custom_call.1} parent=0
    _
  %s11 = ssub.s32 1, %s9
  %s12 = scalar_select 0, %s11, %s9
  $region1: #{tpu_custom_call.1} parent=0
    #allocation2 [shape = 'u8[2048]{0}', space=vmem, size = 0x800, scoped, tag = 'output window, operand 0']
    #allocation3 [shape = 's32[2]{0}', space=sflag, size = 0x8, scoped, tag = 'scoped memory for tpu_custom_call.1']
    %13 = vsyncpa [#allocation3], 0
    %s14 = scalar_lea.sflag [#allocation3], 1
    %15 = vsyncpa %s14, 0
    loop: start=0, step=1, limit=4
    $region2: #{tpu_custom_call.1} parent=1 // loop_pre_header
      _
    $region3: #{tpu_custom_call.1} parent=1 // loop_header
      %s17 = sphi 0, %s21
      %p18 = scmp.ge.s32.totalorder %s17, 4
      %s27 = sphi 0, %s29
      %s30 = sphi 0, %s27
      %s31 = sphi 0, %s30
      %s47 = sphi 0, %s31
      %s51 = sphi 0, %s51
      %s53 = sphi 0, %s51
      %s54 = sphi 0, %s53
      %s68 = sphi 0, %s54
      %s72 = sphi 0, %s72
      %s74 = sphi 0, %s72
      %s75 = sphi 0, %s74
      %s89 = sphi 0, %s75
      %s93 = sphi 0, %s93
      %s95 = sphi 0, %s93
      %s96 = sphi 0, %s95
      %s110 = sphi 0, %s96
      %s114 = sphi 0, %s114
      %s116 = sphi 0, %s114
      %s117 = sphi 0, %s116
      %s131 = sphi 0, %s117
      %s135 = sphi 0, %s135
      %s137 = sphi 0, %s135
      %s138 = sphi 0, %s137
      %s152 = sphi 0, %s138
      %s158 = sphi 0, %s160
      %s161 = sphi 0, %s158
      %s162 = sphi 0, %s161
      %s178 = sphi 0, %s162
      %s184 = sphi 0, %s186
      %s187 = sphi 0, %s184
      %s188 = sphi 0, %s187
      %s204 = sphi 0, %s188
    $region4: #{tpu_custom_call.1} parent=1 // loop_header_branch
      %20 = sbr.rel (%p18) target = $region8
    $region5: #{tpu_custom_call.1} parent=1 // loop_body
      %s22 = ssub.s32 %s17, 1
      %s23 = ssub.s32 %s17, 2
      %s24 = sadd.s32 %s17, 1
      %s25 = ssub.s32 %s17, %s24
      %p26 = scmp.eq.s32.totalorder %s25, 0
      %s28 = sadd.s32 %s27, 1
      %s29 = scalar_select %p26, %s27, %s28
      %p32 = pneg %p26
      %p33 = scmp.eq.s32.totalorder %s17, 1
      %p34 = por %p32, %p33
      %p35 = scmp.ne.s32.totalorder %s27, %s30
      %p36 = scmp.eq.s32.totalorder %s17, 0
      %p37 = por %p35, %p36
      %p38 = scmp.ne.s32.totalorder %s27, %s30
      %p39 = scmp.eq.s32.totalorder %s22, 1
      %p40 = por %p38, %p39
      %p41 = scmp.ne.s32.totalorder %s30, %s31
      %p42 = scmp.eq.s32.totalorder %s22, 0
      %p43 = por %p41, %p42
      %p44 = scmp.ne.s32.totalorder %s30, %s31
      %p45 = scmp.eq.s32.totalorder %s23, 1
      %p46 = por %p44, %p45
      %p48 = scmp.ne.s32.totalorder %s31, %s47
      %p49 = scmp.eq.s32.totalorder %s23, 0
      %p50 = por %p48, %p49
      %s52 = sadd.s32 %s51, 1
      %p55 = scmp.eq.s32.totalorder %s17, 1
      %p56 = scmp.ne.s32.totalorder %s51, %s53
      %p57 = scmp.eq.s32.totalorder %s17, 0
      %p58 = por %p56, %p57
      %p59 = scmp.ne.s32.totalorder %s51, %s53
      %p60 = scmp.eq.s32.totalorder %s22, 1
      %p61 = por %p59, %p60
      %p62 = scmp.ne.s32.totalorder %s53, %s54
      %p63 = scmp.eq.s32.totalorder %s22, 0
      %p64 = por %p62, %p63
      %p65 = scmp.ne.s32.totalorder %s53, %s54
      %p66 = scmp.eq.s32.totalorder %s23, 1
      %p67 = por %p65, %p66
      %p69 = scmp.ne.s32.totalorder %s54, %s68
      %p70 = scmp.eq.s32.totalorder %s23, 0
      %p71 = por %p69, %p70
      %s73 = sadd.s32 %s72, 1
      %p76 = scmp.eq.s32.totalorder %s17, 1
      %p77 = scmp.ne.s32.totalorder %s72, %s74
      %p78 = scmp.eq.s32.totalorder %s17, 0
      %p79 = por %p77, %p78
      %p80 = scmp.ne.s32.totalorder %s72, %s74
      %p81 = scmp.eq.s32.totalorder %s22, 1
      %p82 = por %p80, %p81
      %p83 = scmp.ne.s32.totalorder %s74, %s75
      %p84 = scmp.eq.s32.totalorder %s22, 0
      %p85 = por %p83, %p84
      %p86 = scmp.ne.s32.totalorder %s74, %s75
      %p87 = scmp.eq.s32.totalorder %s23, 1
      %p88 = por %p86, %p87
      %p90 = scmp.ne.s32.totalorder %s75, %s89
      %p91 = scmp.eq.s32.totalorder %s23, 0
      %p92 = por %p90, %p91
      %s94 = sadd.s32 %s93, 1
      %p97 = scmp.eq.s32.totalorder %s17, 1
      %p98 = scmp.ne.s32.totalorder %s93, %s95
      %p99 = scmp.eq.s32.totalorder %s17, 0
      %p100 = por %p98, %p99
      %p101 = scmp.ne.s32.totalorder %s93, %s95
      %p102 = scmp.eq.s32.totalorder %s22, 1
      %p103 = por %p101, %p102
      %p104 = scmp.ne.s32.totalorder %s95, %s96
      %p105 = scmp.eq.s32.totalorder %s22, 0
      %p106 = por %p104, %p105
      %p107 = scmp.ne.s32.totalorder %s95, %s96
      %p108 = scmp.eq.s32.totalorder %s23, 1
      %p109 = por %p107, %p108
      %p111 = scmp.ne.s32.totalorder %s96, %s110
      %p112 = scmp.eq.s32.totalorder %s23, 0
      %p113 = por %p111, %p112
      %s115 = sadd.s32 %s114, 1
      %p118 = scmp.eq.s32.totalorder %s17, 1
      %p119 = scmp.ne.s32.totalorder %s114, %s116
      %p120 = scmp.eq.s32.totalorder %s17, 0
      %p121 = por %p119, %p120
      %p122 = scmp.ne.s32.totalorder %s114, %s116
      %p123 = scmp.eq.s32.totalorder %s22, 1
      %p124 = por %p122, %p123
      %p125 = scmp.ne.s32.totalorder %s116, %s117
      %p126 = scmp.eq.s32.totalorder %s22, 0
      %p127 = por %p125, %p126
      %p128 = scmp.ne.s32.totalorder %s116, %s117
      %p129 = scmp.eq.s32.totalorder %s23, 1
      %p130 = por %p128, %p129
      %p132 = scmp.ne.s32.totalorder %s117, %s131
      %p133 = scmp.eq.s32.totalorder %s23, 0
      %p134 = por %p132, %p133
      %s136 = sadd.s32 %s135, 1
      %p139 = scmp.eq.s32.totalorder %s17, 1
      %p140 = scmp.ne.s32.totalorder %s135, %s137
      %p141 = scmp.eq.s32.totalorder %s17, 0
      %p142 = por %p140, %p141
      %p143 = scmp.ne.s32.totalorder %s135, %s137
      %p144 = scmp.eq.s32.totalorder %s22, 1
      %p145 = por %p143, %p144
      %p146 = scmp.ne.s32.totalorder %s137, %s138
      %p147 = scmp.eq.s32.totalorder %s22, 0
      %p148 = por %p146, %p147
      %p149 = scmp.ne.s32.totalorder %s137, %s138
      %p150 = scmp.eq.s32.totalorder %s23, 1
      %p151 = por %p149, %p150
      %p153 = scmp.ne.s32.totalorder %s138, %s152
      %p154 = scmp.eq.s32.totalorder %s23, 0
      %p155 = por %p153, %p154
      %s156 = ssub.s32 %s17, %s24
      %p157 = scmp.eq.s32.totalorder %s156, 0
      %s159 = sadd.s32 %s158, 1
      %s160 = scalar_select %p157, %s158, %s159
      %p163 = pneg %p157
      %p164 = scmp.eq.s32.totalorder %s17, 1
      %p165 = por %p163, %p164
      %p166 = scmp.ne.s32.totalorder %s158, %s161
      %p167 = scmp.eq.s32.totalorder %s17, 0
      %p168 = por %p166, %p167
      %p169 = scmp.ne.s32.totalorder %s158, %s161
      %p170 = scmp.eq.s32.totalorder %s22, 1
      %p171 = por %p169, %p170
      %p172 = scmp.ne.s32.totalorder %s161, %s162
      %p173 = scmp.eq.s32.totalorder %s22, 0
      %p174 = por %p172, %p173
      %p175 = scmp.ne.s32.totalorder %s161, %s162
      %p176 = scmp.eq.s32.totalorder %s23, 1
      %p177 = por %p175, %p176
      %p179 = scmp.ne.s32.totalorder %s162, %s178
      %p180 = scmp.eq.s32.totalorder %s23, 0
      %p181 = por %p179, %p180
      %s182 = ssub.s32 %s17, %s24
      %p183 = scmp.eq.s32.totalorder %s182, 0
      %s185 = sadd.s32 %s184, 1
      %s186 = scalar_select %p183, %s184, %s185
      %p189 = pneg %p183
      %p190 = scmp.eq.s32.totalorder %s17, 1
      %p191 = por %p189, %p190
      %p192 = scmp.ne.s32.totalorder %s184, %s187
      %p193 = scmp.eq.s32.totalorder %s17, 0
      %p194 = por %p192, %p193
      %p195 = scmp.ne.s32.totalorder %s184, %s187
      %p196 = scmp.eq.s32.totalorder %s22, 1
      %p197 = por %p195, %p196
      %p198 = scmp.ne.s32.totalorder %s187, %s188
      %p199 = scmp.eq.s32.totalorder %s22, 0
      %p200 = por %p198, %p199
      %p201 = scmp.ne.s32.totalorder %s187, %s188
      %p202 = scmp.eq.s32.totalorder %s23, 1
      %p203 = por %p201, %p202
      %p205 = scmp.ne.s32.totalorder %s188, %s204
      %p206 = scmp.eq.s32.totalorder %s23, 0
      %p207 = por %p205, %p206
      %p208 = scmp.le.s32.totalorder 1, %s17
      %p209 = scmp.lt.s32.totalorder %s17, 3
      %p210 = pnand %p208, %p209
      %p211 = pneg %p210
      // Predicated region
      $region9: #{tpu_custom_call.1} parent=5 // pred_check
        _
      $region10: #{tpu_custom_call.1} parent=5 // pred_check_branch
        %213 = sbr.rel (%p210) target = $region12
      $region11: #{tpu_custom_call.1} parent=5 // pred_region
        %s214 = ssub.s32 %s17, 1
        // Predicated region
        $region13: #{tpu_custom_call.1} parent=11 // pred_check
          %p215 = pneg %p64
        $region14: #{tpu_custom_call.1} parent=11 // pred_check_branch
          %217 = sbr.rel (%p215) target = $region16
        $region15: #{tpu_custom_call.1} parent=11 // pred_region
          _
        $region16: #{tpu_custom_call.1} parent=11 // pred_fallthru
          _
        // Predicated region
        $region17: #{tpu_custom_call.1} parent=11 // pred_check
          %p218 = pneg %p85
        $region18: #{tpu_custom_call.1} parent=11 // pred_check_branch
          %220 = sbr.rel (%p218) target = $region20
        $region19: #{tpu_custom_call.1} parent=11 // pred_region
          _
        $region20: #{tpu_custom_call.1} parent=11 // pred_fallthru
          _
        // Predicated region
        $region21: #{tpu_custom_call.1} parent=11 // pred_check
          %p221 = pneg %p106
        $region22: #{tpu_custom_call.1} parent=11 // pred_check_branch
          %223 = sbr.rel (%p221) target = $region24
        $region23: #{tpu_custom_call.1} parent=11 // pred_region
          _
        $region24: #{tpu_custom_call.1} parent=11 // pred_fallthru
          _
        // Predicated region
        $region25: #{tpu_custom_call.1} parent=11 // pred_check
          %p224 = pneg %p127
        $region26: #{tpu_custom_call.1} parent=11 // pred_check_branch
          %226 = sbr.rel (%p224) target = $region28
        $region27: #{tpu_custom_call.1} parent=11 // pred_region
          _
        $region28: #{tpu_custom_call.1} parent=11 // pred_fallthru
          _
        // Predicated region
        $region29: #{tpu_custom_call.1} parent=11 // pred_check
          %p227 = pneg %p148
        $region30: #{tpu_custom_call.1} parent=11 // pred_check_branch
          %229 = sbr.rel (%p227) target = $region32
        $region31: #{tpu_custom_call.1} parent=11 // pred_region
          _
        $region32: #{tpu_custom_call.1} parent=11 // pred_fallthru
          _
      $region12: #{tpu_custom_call.1} parent=5 // pred_fallthru
        _
      %p230 = scmp.lt.s32.totalorder %s17, 2
      // Predicated region
      $region33: #{tpu_custom_call.1} parent=5 // pred_check
        %p231 = pneg %p230
      $region34: #{tpu_custom_call.1} parent=5 // pred_check_branch
        %233 = sbr.rel (%p231) target = $region36
      $region35: #{tpu_custom_call.1} parent=5 // pred_region
        // Predicated region
        $region37: #{tpu_custom_call.1} parent=35 // pred_check
          %p234 = pneg %p37
        $region38: #{tpu_custom_call.1} parent=35 // pred_check_branch
          %236 = sbr.rel (%p234) target = $region40
        $region39: #{tpu_custom_call.1} parent=35 // pred_region
          %p237 = scmp.lt.s32.totalorder %s17, 1
          %s238 = scalar_select %p237, %s17, 1
          %s239 = smul.addr %s238, 16
          %s240 = smul.addr %s239, 8
          %s241 = scalar_lea.vmem %s0, %s240
        $region40: #{tpu_custom_call.1} parent=35 // pred_fallthru
          _
      $region36: #{tpu_custom_call.1} parent=5 // pred_fallthru
        _
      %p242 = scmp.le.s32.totalorder 1, %s17
      %p243 = scmp.lt.s32.totalorder %s17, 3
      %p244 = pnand %p242, %p243
      %p245 = pneg %p244
      // Predicated region
      $region41: #{tpu_custom_call.1} parent=5 // pred_check
        _
      $region42: #{tpu_custom_call.1} parent=5 // pred_check_branch
        %247 = sbr.rel (%p244) target = $region44
      $region43: #{tpu_custom_call.1} parent=5 // pred_region
        %s248 = ssub.s32 %s17, 1
        %p249 = scmp.lt.s32.totalorder %s22, 1
        %s250 = scalar_select %p249, %s22, 1
        %s251 = smul.addr %s250, 16
        %s252 = smul.addr %s251, 8
        %s253 = scalar_lea.vmem %s0, %s252
        %p254 = pneg %p43
        %p255 = pneg %p40
        %p256 = pneg %p64
        %p257 = pneg %p61
        %p258 = pneg %p85
        %p259 = pneg %p82
        %p260 = pneg %p106
        %p261 = pneg %p103
        %p262 = pneg %p127
        %p263 = pneg %p124
        %p264 = pneg %p148
        %p265 = pneg %p145
        %p266 = pneg %p174
        %p267 = pneg %p171
        %s268 = sand.u32 %s161, 1
        %s269 = scalar_lea.sflag [#allocation3], %s268
        %s270 = sand.u32 %s161, 1
        %s271 = smul.addr %s270, 2
        %s272 = scalar_lea.vmem [#allocation2], %s271
        %p273 = pneg %p200
        %p274 = pneg %p197
        %p275 = scmp.lt.s32.totalorder %s22, 1
        %s276 = scalar_select %p275, %s22, 1
        %s277 = smul.addr %s276, 8
        %s278 = smul.addr %s277, 8
        %s279 = scalar_lea.vmem %s7, %s278
        %p280 = scmp.lt.s32.totalorder %s22, 1
        %s281 = scalar_select %p280, %s22, 1
        %s282 = smul.addr %s281, 16
        %s283 = smul.addr %s282, 8
        %s284 = scalar_lea.vmem %s0, %s283
        %p285 = scmp.lt.s32.totalorder %s22, 1
        %s286 = scalar_select %p285, %s22, 1
        %s287 = smul.addr %s286, 8
        %s288 = smul.addr %s287, 8
        %s289 = scalar_lea.vmem %s7, %s288
        %v290 = vld [vmem:[%s284] sm:$0xff]
        %v291 = vld [vmem:[%s284 + $0x8] sm:$0xff]
        %v292 = vld [vmem:[%s284 + $0x10] sm:$0xff]
        %v293 = vld [vmem:[%s284 + $0x18] sm:$0xff]
        %v294 = vld [vmem:[%s284 + $0x20] sm:$0xff]
        %v295 = vld [vmem:[%s284 + $0x28] sm:$0xff]
        %v296 = vld [vmem:[%s284 + $0x30] sm:$0xff]
        %v297 = vld [vmem:[%s284 + $0x38] sm:$0xff]
        %v298 = vld [vmem:[%s284 + $0x40] sm:$0xff]
        %v299 = vld [vmem:[%s284 + $0x48] sm:$0xff]
        %v300 = vld [vmem:[%s284 + $0x50] sm:$0xff]
        %v301 = vld [vmem:[%s284 + $0x58] sm:$0xff]
        %v302 = vld [vmem:[%s284 + $0x60] sm:$0xff]
        %v303 = vld [vmem:[%s284 + $0x68] sm:$0xff]
        %v304 = vld [vmem:[%s284 + $0x70] sm:$0xff]
        %v305 = vld [vmem:[%s284 + $0x78] sm:$0xff]
        %v306 = vld [vmem:[%s1] sm:$0xff]
        %vm307 = vcmask 64512
        %v309 = vsel %vm307, %v290, 0
        %v312 = vsel %vm307, %v291, 0
        %v315 = vsel %vm307, %v292, 0
        %v318 = vsel %vm307, %v293, 0
        %v321 = vsel %vm307, %v294, 0
        %v324 = vsel %vm307, %v295, 0
        %v327 = vsel %vm307, %v296, 0
        %v330 = vsel %vm307, %v297, 0
        %v333 = vsel %vm307, %v298, 0
        %v336 = vsel %vm307, %v299, 0
        %v339 = vsel %vm307, %v300, 0
        %v342 = vsel %vm307, %v301, 0
        %v345 = vsel %vm307, %v302, 0
        %v348 = vsel %vm307, %v303, 0
        %v351 = vsel %vm307, %v304, 0
        %v354 = vsel %vm307, %v305, 0
        %356 = vmatpush.msra.mxu0 0.0
        %357 = vmatpush.msra.mxu0 0.0
        %358 = vmatpush.msra.mxu0 0.0
        %359 = vmatpush.msra.mxu0 0.0
        %360 = vmatpush.msra.mxu0 0.0
        %361 = vmatpush.msra.mxu0 0.0
        %362 = vmatpush.msra.mxu0 0.0
        %363 = vmatpush.msra.mxu0 0.0
        %364 = vmatpush.msra.mxu0 0.0
        %365 = vmatpush.msra.mxu0 0.0
        %366 = vmatpush.msra.mxu0 0.0
        %367 = vmatpush.msra.mxu0 0.0
        %368 = vmatpush.msra.mxu0 0.0
        %369 = vmatpush.msra.mxu0 0.0
        %370 = vmatpush.msra.mxu0 0.0
        %371 = vmatpush.msra.mxu0 %v306
        %372 = vmatmul.f32.gmra.mxu0 %v309
        %v373 = vpop.f32.mrf.mxu0
        %v374 = vadd.f32 0.0, %v373
        %375 = vmatmul.f32.gmra.mxu0 %v312
        %v376 = vpop.f32.mrf.mxu0
        %v377 = vadd.f32 0.0, %v376
        %378 = vmatmul.f32.gmra.mxu0 %v315
        %v379 = vpop.f32.mrf.mxu0
        %v380 = vadd.f32 0.0, %v379
        %381 = vmatmul.f32.gmra.mxu0 %v318
        %v382 = vpop.f32.mrf.mxu0
        %v383 = vadd.f32 0.0, %v382
        %384 = vmatmul.f32.gmra.mxu0 %v321
        %v385 = vpop.f32.mrf.mxu0
        %v386 = vadd.f32 0.0, %v385
        %387 = vmatmul.f32.gmra.mxu0 %v324
        %v388 = vpop.f32.mrf.mxu0
        %v389 = vadd.f32 0.0, %v388
        %390 = vmatmul.f32.gmra.mxu0 %v327
        %v391 = vpop.f32.mrf.mxu0
        %v392 = vadd.f32 0.0, %v391
        %393 = vmatmul.f32.gmra.mxu0 %v330
        %v394 = vpop.f32.mrf.mxu0
        %v395 = vadd.f32 0.0, %v394
        %396 = vmatmul.f32.gmra.mxu0 %v333
        %v397 = vpop.f32.mrf.mxu0
        %v398 = vadd.f32 0.0, %v397
        %399 = vmatmul.f32.gmra.mxu0 %v336
        %v400 = vpop.f32.mrf.mxu0
        %v401 = vadd.f32 0.0, %v400
        %402 = vmatmul.f32.gmra.mxu0 %v339
        %v403 = vpop.f32.mrf.mxu0
        %v404 = vadd.f32 0.0, %v403
        %405 = vmatmul.f32.gmra.mxu0 %v342
        %v406 = vpop.f32.mrf.mxu0
        %v407 = vadd.f32 0.0, %v406
        %408 = vmatmul.f32.gmra.mxu0 %v345
        %v409 = vpop.f32.mrf.mxu0
        %v410 = vadd.f32 0.0, %v409
        %411 = vmatmul.f32.gmra.mxu0 %v348
        %v412 = vpop.f32.mrf.mxu0
        %v413 = vadd.f32 0.0, %v412
        %414 = vmatmul.f32.gmra.mxu0 %v351
        %v415 = vpop.f32.mrf.mxu0
        %v416 = vadd.f32 0.0, %v415
        %417 = vmatmul.f32.gmra.mxu0 %v354
        %v418 = vpop.f32.mrf.mxu0
        %v419 = vadd.f32 0.0, %v418
        %420 = vdwg.mxu0
        %v421 = vld [vmem:[%s2] sm:$0xff]
        %422 = vmatpush.msra.mxu0 0.0
        %423 = vmatpush.msra.mxu0 0.0
        %424 = vmatpush.msra.mxu0 0.0
        %425 = vmatpush.msra.mxu0 0.0
        %426 = vmatpush.msra.mxu0 0.0
        %427 = vmatpush.msra.mxu0 0.0
        %428 = vmatpush.msra.mxu0 0.0
        %429 = vmatpush.msra.mxu0 0.0
        %430 = vmatpush.msra.mxu0 0.0
        %431 = vmatpush.msra.mxu0 0.0
        %432 = vmatpush.msra.mxu0 0.0
        %433 = vmatpush.msra.mxu0 0.0
        %434 = vmatpush.msra.mxu0 0.0
        %435 = vmatpush.msra.mxu0 0.0
        %436 = vmatpush.msra.mxu0 0.0
        %437 = vmatpush.msra.mxu0 %v421
        %438 = vmatmul.f32.gmra.mxu0 %v309
        %v439 = vpop.f32.mrf.mxu0
        %v440 = vadd.f32 0.0, %v439
        %441 = vmatmul.f32.gmra.mxu0 %v312
        %v442 = vpop.f32.mrf.mxu0
        %v443 = vadd.f32 0.0, %v442
        %444 = vmatmul.f32.gmra.mxu0 %v315
        %v445 = vpop.f32.mrf.mxu0
        %v446 = vadd.f32 0.0, %v445
        %447 = vmatmul.f32.gmra.mxu0 %v318
        %v448 = vpop.f32.mrf.mxu0
        %v449 = vadd.f32 0.0, %v448
        %450 = vmatmul.f32.gmra.mxu0 %v321
        %v451 = vpop.f32.mrf.mxu0
        %v452 = vadd.f32 0.0, %v451
        %453 = vmatmul.f32.gmra.mxu0 %v324
        %v454 = vpop.f32.mrf.mxu0
        %v455 = vadd.f32 0.0, %v454
        %456 = vmatmul.f32.gmra.mxu0 %v327
        %v457 = vpop.f32.mrf.mxu0
        %v458 = vadd.f32 0.0, %v457
        %459 = vmatmul.f32.gmra.mxu0 %v330
        %v460 = vpop.f32.mrf.mxu0
        %v461 = vadd.f32 0.0, %v460
        %462 = vmatmul.f32.gmra.mxu0 %v333
        %v463 = vpop.f32.mrf.mxu0
        %v464 = vadd.f32 0.0, %v463
        %465 = vmatmul.f32.gmra.mxu0 %v336
        %v466 = vpop.f32.mrf.mxu0
        %v467 = vadd.f32 0.0, %v466
        %468 = vmatmul.f32.gmra.mxu0 %v339
        %v469 = vpop.f32.mrf.mxu0
        %v470 = vadd.f32 0.0, %v469
        %471 = vmatmul.f32.gmra.mxu0 %v342
        %v472 = vpop.f32.mrf.mxu0
        %v473 = vadd.f32 0.0, %v472
        %474 = vmatmul.f32.gmra.mxu0 %v345
        %v475 = vpop.f32.mrf.mxu0
        %v476 = vadd.f32 0.0, %v475
        %477 = vmatmul.f32.gmra.mxu0 %v348
        %v478 = vpop.f32.mrf.mxu0
        %v479 = vadd.f32 0.0, %v478
        %480 = vmatmul.f32.gmra.mxu0 %v351
        %v481 = vpop.f32.mrf.mxu0
        %v482 = vadd.f32 0.0, %v481
        %483 = vmatmul.f32.gmra.mxu0 %v354
        %v484 = vpop.f32.mrf.mxu0
        %v485 = vadd.f32 0.0, %v484
        %486 = vdwg.mxu0
        %v487 = vmax.f32 %v374, %v440
        %v488 = vmax.f32 %v377, %v443
        %v489 = vmax.f32 %v380, %v446
        %v490 = vmax.f32 %v383, %v449
        %v491 = vmax.f32 %v386, %v452
        %v492 = vmax.f32 %v389, %v455
        %v493 = vmax.f32 %v392, %v458
        %v494 = vmax.f32 %v395, %v461
        %v495 = vmax.f32 %v398, %v464
        %v496 = vmax.f32 %v401, %v467
        %v497 = vmax.f32 %v404, %v470
        %v498 = vmax.f32 %v407, %v473
        %v499 = vmax.f32 %v410, %v476
        %v500 = vmax.f32 %v413, %v479
        %v501 = vmax.f32 %v416, %v482
        %v502 = vmax.f32 %v419, %v485
        %vm503 = vcmask 15360
        %v504 = vsel %vm503, %v487, -inf
        %v505 = vsel %vm503, %v488, -inf
        %v506 = vmax.f32 %v504, %v505
        %v507 = vsel %vm503, %v489, -inf
        %v508 = vsel %vm503, %v490, -inf
        %v509 = vmax.f32 %v507, %v508
        %v510 = vsel %vm503, %v491, -inf
        %v511 = vsel %vm503, %v492, -inf
        %v512 = vmax.f32 %v510, %v511
        %v513 = vsel %vm503, %v493, -inf
        %v514 = vsel %vm503, %v494, -inf
        %v515 = vmax.f32 %v513, %v514
        %v516 = vsel %vm503, %v495, -inf
        %v517 = vsel %vm503, %v496, -inf
        %v518 = vmax.f32 %v516, %v517
        %v519 = vsel %vm503, %v497, -inf
        %v520 = vsel %vm503, %v498, -inf
        %v521 = vmax.f32 %v519, %v520
        %v522 = vsel %vm503, %v499, -inf
        %v523 = vsel %vm503, %v500, -inf
        %v524 = vmax.f32 %v522, %v523
        %v525 = vsel %vm503, %v501, -inf
        %v526 = vsel %vm503, %v502, -inf
        %v527 = vmax.f32 %v525, %v526
        %v528 = vld [vmem:[%s3] sm:$0xff]
        %529 = vmatpush.msra.mxu0 0.0
        %530 = vmatpush.msra.mxu0 0.0
        %531 = vmatpush.msra.mxu0 0.0
        %532 = vmatpush.msra.mxu0 0.0
        %533 = vmatpush.msra.mxu0 0.0
        %534 = vmatpush.msra.mxu0 0.0
        %535 = vmatpush.msra.mxu0 0.0
        %536 = vmatpush.msra.mxu0 0.0
        %537 = vmatpush.msra.mxu0 0.0
        %538 = vmatpush.msra.mxu0 0.0
        %539 = vmatpush.msra.mxu0 0.0
        %540 = vmatpush.msra.mxu0 0.0
        %541 = vmatpush.msra.mxu0 0.0
        %542 = vmatpush.msra.mxu0 0.0
        %543 = vmatpush.msra.mxu0 0.0
        %544 = vmatpush.msra.mxu0 %v528
        %545 = vmatmul.f32.gmra.mxu0 %v309
        %v546 = vpop.f32.mrf.mxu0
        %v547 = vadd.f32 0.0, %v546
        %548 = vmatmul.f32.gmra.mxu0 %v312
        %v549 = vpop.f32.mrf.mxu0
        %v550 = vadd.f32 0.0, %v549
        %551 = vmatmul.f32.gmra.mxu0 %v315
        %v552 = vpop.f32.mrf.mxu0
        %v553 = vadd.f32 0.0, %v552
        %554 = vmatmul.f32.gmra.mxu0 %v318
        %v555 = vpop.f32.mrf.mxu0
        %v556 = vadd.f32 0.0, %v555
        %557 = vmatmul.f32.gmra.mxu0 %v321
        %v558 = vpop.f32.mrf.mxu0
        %v559 = vadd.f32 0.0, %v558
        %560 = vmatmul.f32.gmra.mxu0 %v324
        %v561 = vpop.f32.mrf.mxu0
        %v562 = vadd.f32 0.0, %v561
        %563 = vmatmul.f32.gmra.mxu0 %v327
        %v564 = vpop.f32.mrf.mxu0
        %v565 = vadd.f32 0.0, %v564
        %566 = vmatmul.f32.gmra.mxu0 %v330
        %v567 = vpop.f32.mrf.mxu0
        %v568 = vadd.f32 0.0, %v567
        %569 = vmatmul.f32.gmra.mxu0 %v333
        %v570 = vpop.f32.mrf.mxu0
        %v571 = vadd.f32 0.0, %v570
        %572 = vmatmul.f32.gmra.mxu0 %v336
        %v573 = vpop.f32.mrf.mxu0
        %v574 = vadd.f32 0.0, %v573
        %575 = vmatmul.f32.gmra.mxu0 %v339
        %v576 = vpop.f32.mrf.mxu0
        %v577 = vadd.f32 0.0, %v576
        %578 = vmatmul.f32.gmra.mxu0 %v342
        %v579 = vpop.f32.mrf.mxu0
        %v580 = vadd.f32 0.0, %v579
        %581 = vmatmul.f32.gmra.mxu0 %v345
        %v582 = vpop.f32.mrf.mxu0
        %v583 = vadd.f32 0.0, %v582
        %584 = vmatmul.f32.gmra.mxu0 %v348
        %v585 = vpop.f32.mrf.mxu0
        %v586 = vadd.f32 0.0, %v585
        %587 = vmatmul.f32.gmra.mxu0 %v351
        %v588 = vpop.f32.mrf.mxu0
        %v589 = vadd.f32 0.0, %v588
        %590 = vmatmul.f32.gmra.mxu0 %v354
        %v591 = vpop.f32.mrf.mxu0
        %v592 = vadd.f32 0.0, %v591
        %593 = vdwg.mxu0
        %v594 = vld [vmem:[%s4] sm:$0xff]
        %595 = vmatpush.msra.mxu0 0.0
        %596 = vmatpush.msra.mxu0 0.0
        %597 = vmatpush.msra.mxu0 0.0
        %598 = vmatpush.msra.mxu0 0.0
        %599 = vmatpush.msra.mxu0 0.0
        %600 = vmatpush.msra.mxu0 0.0
        %601 = vmatpush.msra.mxu0 0.0
        %602 = vmatpush.msra.mxu0 0.0
        %603 = vmatpush.msra.mxu0 0.0
        %604 = vmatpush.msra.mxu0 0.0
        %605 = vmatpush.msra.mxu0 0.0
        %606 = vmatpush.msra.mxu0 0.0
        %607 = vmatpush.msra.mxu0 0.0
        %608 = vmatpush.msra.mxu0 0.0
        %609 = vmatpush.msra.mxu0 0.0
        %610 = vmatpush.msra.mxu0 %v594
        %611 = vmatmul.f32.gmra.mxu0 %v309
        %v612 = vpop.f32.mrf.mxu0
        %v613 = vadd.f32 0.0, %v612
        %614 = vmatmul.f32.gmra.mxu0 %v312
        %v615 = vpop.f32.mrf.mxu0
        %v616 = vadd.f32 0.0, %v615
        %617 = vmatmul.f32.gmra.mxu0 %v315
        %v618 = vpop.f32.mrf.mxu0
        %v619 = vadd.f32 0.0, %v618
        %620 = vmatmul.f32.gmra.mxu0 %v318
        %v621 = vpop.f32.mrf.mxu0
        %v622 = vadd.f32 0.0, %v621
        %623 = vmatmul.f32.gmra.mxu0 %v321
        %v624 = vpop.f32.mrf.mxu0
        %v625 = vadd.f32 0.0, %v624
        %626 = vmatmul.f32.gmra.mxu0 %v324
        %v627 = vpop.f32.mrf.mxu0
        %v628 = vadd.f32 0.0, %v627
        %629 = vmatmul.f32.gmra.mxu0 %v327
        %v630 = vpop.f32.mrf.mxu0
        %v631 = vadd.f32 0.0, %v630
        %632 = vmatmul.f32.gmra.mxu0 %v330
        %v633 = vpop.f32.mrf.mxu0
        %v634 = vadd.f32 0.0, %v633
        %635 = vmatmul.f32.gmra.mxu0 %v333
        %v636 = vpop.f32.mrf.mxu0
        %v637 = vadd.f32 0.0, %v636
        %638 = vmatmul.f32.gmra.mxu0 %v336
        %v639 = vpop.f32.mrf.mxu0
        %v640 = vadd.f32 0.0, %v639
        %641 = vmatmul.f32.gmra.mxu0 %v339
        %v642 = vpop.f32.mrf.mxu0
        %v643 = vadd.f32 0.0, %v642
        %644 = vmatmul.f32.gmra.mxu0 %v342
        %v645 = vpop.f32.mrf.mxu0
        %v646 = vadd.f32 0.0, %v645
        %647 = vmatmul.f32.gmra.mxu0 %v345
        %v648 = vpop.f32.mrf.mxu0
        %v649 = vadd.f32 0.0, %v648
        %650 = vmatmul.f32.gmra.mxu0 %v348
        %v651 = vpop.f32.mrf.mxu0
        %v652 = vadd.f32 0.0, %v651
        %653 = vmatmul.f32.gmra.mxu0 %v351
        %v654 = vpop.f32.mrf.mxu0
        %v655 = vadd.f32 0.0, %v654
        %656 = vmatmul.f32.gmra.mxu0 %v354
        %v657 = vpop.f32.mrf.mxu0
        %v658 = vadd.f32 0.0, %v657
        %659 = vdwg.mxu0
        %v660 = vmax.f32 %v547, %v613
        %v661 = vmax.f32 %v550, %v616
        %v662 = vmax.f32 %v553, %v619
        %v663 = vmax.f32 %v556, %v622
        %v664 = vmax.f32 %v559, %v625
        %v665 = vmax.f32 %v562, %v628
        %v666 = vmax.f32 %v565, %v631
        %v667 = vmax.f32 %v568, %v634
        %v668 = vmax.f32 %v571, %v637
        %v669 = vmax.f32 %v574, %v640
        %v670 = vmax.f32 %v577, %v643
        %v671 = vmax.f32 %v580, %v646
        %v672 = vmax.f32 %v583, %v649
        %v673 = vmax.f32 %v586, %v652
        %v674 = vmax.f32 %v589, %v655
        %v675 = vmax.f32 %v592, %v658
        %v676 = vsel %vm503, %v660, -inf
        %v677 = vsel %vm503, %v661, -inf
        %v678 = vmax.f32 %v676, %v677
        %v679 = vsel %vm503, %v662, -inf
        %v680 = vsel %vm503, %v663, -inf
        %v681 = vmax.f32 %v679, %v680
        %v682 = vsel %vm503, %v664, -inf
        %v683 = vsel %vm503, %v665, -inf
        %v684 = vmax.f32 %v682, %v683
        %v685 = vsel %vm503, %v666, -inf
        %v686 = vsel %vm503, %v667, -inf
        %v687 = vmax.f32 %v685, %v686
        %v688 = vsel %vm503, %v668, -inf
        %v689 = vsel %vm503, %v669, -inf
        %v690 = vmax.f32 %v688, %v689
        %v691 = vsel %vm503, %v670, -inf
        %v692 = vsel %vm503, %v671, -inf
        %v693 = vmax.f32 %v691, %v692
        %v694 = vsel %vm503, %v672, -inf
        %v695 = vsel %vm503, %v673, -inf
        %v696 = vmax.f32 %v694, %v695
        %v697 = vsel %vm503, %v674, -inf
        %v698 = vsel %vm503, %v675, -inf
        %v699 = vmax.f32 %v697, %v698
        %v700 = vld [vmem:[%s5] sm:$0x1]
        %v702 = vperm.slane %v700, 0
        %v704 = vadd.f32 %v678, %v702
        %v705 = vadd.f32 %v681, %v702
        %v706 = vadd.f32 %v684, %v702
        %v707 = vadd.f32 %v687, %v702
        %v708 = vadd.f32 %v690, %v702
        %v709 = vadd.f32 %v693, %v702
        %v710 = vadd.f32 %v696, %v702
        %v711 = vadd.f32 %v699, %v702
        %712 = vxpose.xlu0.b32.start [1/16] %v506, 128
        %713 = vxpose.xlu0.b32.cont [2/16] %v509, 128
        %714 = vxpose.xlu0.b32.cont [3/16] %v512, 128
        %715 = vxpose.xlu0.b32.cont [4/16] %v515, 128
        %716 = vxpose.xlu0.b32.cont [5/16] %v518, 128
        %717 = vxpose.xlu0.b32.cont [6/16] %v521, 128
        %718 = vxpose.xlu0.b32.cont [7/16] %v524, 128
        %719 = vxpose.xlu0.b32.cont [8/16] %v527, 128
        %720 = vxpose.xlu0.b32.cont [9/16] 0.0, 128
        %721 = vxpose.xlu0.b32.cont [10/16] 0.0, 128
        %722 = vxpose.xlu0.b32.cont [11/16] 0.0, 128
        %723 = vxpose.xlu0.b32.cont [12/16] 0.0, 128
        %724 = vxpose.xlu0.b32.cont [13/16] 0.0, 128
        %725 = vxpose.xlu0.b32.cont [14/16] 0.0, 128
        %726 = vxpose.xlu0.b32.cont [15/16] 0.0, 128
        %727 = vxpose.xlu0.b32.end [16/16] 0.0, 128
        %v728 = vpop.trf.xlu0
        %v729 = vpop.trf.xlu0
        %v730 = vpop.trf.xlu0
        %v731 = vpop.trf.xlu0
        %v732 = vpop.trf.xlu0
        %v733 = vpop.trf.xlu0
        %v734 = vpop.trf.xlu0
        %v735 = vpop.trf.xlu0
        %v736 = vpop.trf.xlu0
        %v737 = vpop.trf.xlu0
        %v738 = vpop.trf.xlu0
        %v739 = vpop.trf.xlu0
        %v740 = vpop.trf.xlu0
        %v741 = vpop.trf.xlu0
        %v742 = vpop.trf.xlu0
        %v743 = vpop.trf.xlu0
        %vm744 = vcmask 517120
        %745 = vst.msk [vmem:[%s272] sm:$0x3] %vm744, %v728
        %746 = vst.msk [vmem:[%s289] sm:$0xff] %vm503, %v704
        %747 = vst.msk [vmem:[%s289 + $0x8] sm:$0xff] %vm503, %v705
        %748 = vst.msk [vmem:[%s289 + $0x10] sm:$0xff] %vm503, %v706
        %749 = vst.msk [vmem:[%s289 + $0x18] sm:$0xff] %vm503, %v707
        %750 = vst.msk [vmem:[%s289 + $0x20] sm:$0xff] %vm503, %v708
        %751 = vst.msk [vmem:[%s289 + $0x28] sm:$0xff] %vm503, %v709
        %752 = vst.msk [vmem:[%s289 + $0x30] sm:$0xff] %vm503, %v710
        %753 = vst.msk [vmem:[%s289 + $0x38] sm:$0xff] %vm503, %v711
        %s754 = sand.u32 %s161, 1
        %s755 = scalar_lea.sflag [#allocation3], %s754
        %s756 = sand.u32 %s161, 1
        %s757 = smul.addr %s756, 2
        %s758 = scalar_lea.vmem [#allocation2], %s757
        %p759 = scmp.lt.s32.totalorder %s22, 1
        %s760 = scalar_select %p759, %s22, 1
        %s761 = smul.addr %s760, 8
        %s762 = smul.addr %s761, 8
        %s763 = scalar_lea.vmem %s7, %s762
        // Predicated region
        $region45: #{tpu_custom_call.1} parent=43 // pred_check
          %p764 = pneg %p171
        $region46: #{tpu_custom_call.1} parent=43 // pred_check_branch
          %766 = sbr.rel (%p764) target = $region48
        $region47: #{tpu_custom_call.1} parent=43 // pred_region
          %768 = vsyncadd %s755, 0
          %s769 = smul.addr %s22, 2
          %s770 = scalar_lea.hbm %s6, %s769
          %s772 = sshll.u32 %s758, 4
          %s773 = int_to_ptr.vmem [resolvable:$true] %s772
          %s774 = sshll.u32 %s770, 4
          %s775 = int_to_ptr.hbm [resolvable:$true] %s774
          %777 = dma.vmem_to_hbm [thread:$0]  %s773, 32, %s775, %s755
        $region48: #{tpu_custom_call.1} parent=43 // pred_fallthru
          _
        // Predicated region
        $region49: #{tpu_custom_call.1} parent=43 // pred_check
          %p778 = pneg %p197
        $region50: #{tpu_custom_call.1} parent=43 // pred_check_branch
          %780 = sbr.rel (%p778) target = $region52
        $region51: #{tpu_custom_call.1} parent=43 // pred_region
          _
        $region52: #{tpu_custom_call.1} parent=43 // pred_fallthru
          _
      $region44: #{tpu_custom_call.1} parent=5 // pred_fallthru
        _
      %p781 = scmp.le.s32.totalorder 2, %s17
      // Predicated region
      $region53: #{tpu_custom_call.1} parent=5 // pred_check
        %p782 = pneg %p781
      $region54: #{tpu_custom_call.1} parent=5 // pred_check_branch
        %784 = sbr.rel (%p782) target = $region56
      $region55: #{tpu_custom_call.1} parent=5 // pred_region
        %s785 = ssub.s32 %s17, 2
        // Predicated region
        $region57: #{tpu_custom_call.1} parent=55 // pred_check
          %p786 = pneg %p177
        $region58: #{tpu_custom_call.1} parent=55 // pred_check_branch
          %788 = sbr.rel (%p786) target = $region60
        $region59: #{tpu_custom_call.1} parent=55 // pred_region
          %s789 = sand.u32 %s162, 1
          %s790 = scalar_lea.sflag [#allocation3], %s789
          %s791 = sand.u32 %s162, 1
          %s792 = smul.addr %s791, 2
          %s793 = scalar_lea.vmem [#allocation2], %s792
          %795 = dma.done %s790, 32
        $region60: #{tpu_custom_call.1} parent=55 // pred_fallthru
          _
        // Predicated region
        $region61: #{tpu_custom_call.1} parent=55 // pred_check
          %p796 = pneg %p203
        $region62: #{tpu_custom_call.1} parent=55 // pred_check_branch
          %798 = sbr.rel (%p796) target = $region64
        $region63: #{tpu_custom_call.1} parent=55 // pred_region
          %p799 = scmp.lt.s32.totalorder %s23, 1
          %s800 = scalar_select %p799, %s23, 1
          %s801 = smul.addr %s800, 8
          %s802 = smul.addr %s801, 8
          %s803 = scalar_lea.vmem %s7, %s802
        $region64: #{tpu_custom_call.1} parent=55 // pred_fallthru
          _
      $region56: #{tpu_custom_call.1} parent=5 // pred_fallthru
        _
    $region6: #{tpu_custom_call.1} parent=1 // loop_footer
      %s21 = sadd.s32 1, %s17
    $region7: #{tpu_custom_call.1} parent=1 // loop_footer_branch
      %16 = sbr.rel target = $region3
    $region8: #{tpu_custom_call.1} parent=1 // loop_exit
      _
    %804 = vsyncpa [#allocation3], 1
    %s805 = scalar_lea.sflag [#allocation3], 1
    %806 = vsyncpa %s805, 1

</llo_original>
